<compile_context>
chip_gen: v7x
topology: tpu7x:2x2x1
jax: 0.10.0
libtpu: 0.0.40
codegen_flags: <defaults>
</compile_context>

<pallas_src>
import jax
import jax.numpy as jnp
from jax.experimental import pallas as pl
from jax.experimental.pallas import tpu as pltpu


def _round_up(x: int, m: int) -> int:
    return ((x + m - 1) // m) * m


def _gather_kernel(idx_ref, table_ref, out_ref):
    # idx_ref:   (TILE_N, 1) int32   — indices for this output tile (VMEM)
    # table_ref: (t_len, C_pad)      — full table, resident in VMEM (index_map const)
    # out_ref:   (TILE_N, C_pad)     — dense output tile
    tile_n = idx_ref.shape[0]
    t_len = table_ref.shape[0]

    idx = idx_ref[...]                                            # (TILE_N, 1)
    row_ids = jax.lax.broadcasted_iota(jnp.int32, (tile_n, t_len), 1)
    one_hot = (idx == row_ids).astype(table_ref.dtype)            # (TILE_N, t_len)

    gathered = jnp.dot(one_hot, table_ref[...],
                       preferred_element_type=jnp.float32)        # MXU gather
    out_ref[...] = gathered.astype(out_ref.dtype)


def grid_t_forward(grid_param: jax.Array, t: jax.Array, *, tile_n: int = 256) -> jax.Array:
    """Pallas equivalent of Grid_t.forward: returns grid_param[t]."""
    t_len, channels = grid_param.shape
    dtype = grid_param.dtype
    itemsize = jnp.dtype(dtype).itemsize

    # Pad channel axis to a multiple of 128 so all loads/stores are lane-dense.
    c_pad = _round_up(channels, 128)
    table = grid_param
    if c_pad != channels:
        table = jnp.pad(grid_param, ((0, 0), (0, c_pad - channels)))

    # Flatten indices; emulate PyTorch negative indexing, clamp OOB defensively.
    idx = t.reshape(-1).astype(jnp.int32)
    n = idx.shape[0]
    idx = jnp.where(idx < 0, idx + t_len, idx)
    idx = jnp.clip(idx, 0, t_len - 1)

    # Choose a dense tile size (multiple of 8 sublanes) and pad n to it.
    tile = tile_n if n >= tile_n else _round_up(max(n, 1), 8)
    n_pad = _round_up(n, tile)
    if n_pad != n:
        idx = jnp.pad(idx, (0, n_pad - n))          # pad rows gather row 0, sliced off later
    idx2 = idx.reshape(n_pad, 1)

    num_tiles = n_pad // tile

    out_padded = pl.pallas_call(
        _gather_kernel,
        out_shape=jax.ShapeDtypeStruct((n_pad, c_pad), dtype),
        grid=(num_tiles,),
        in_specs=[
            # Per-tile index column (TILE_N, 1) in VMEM.
            pl.BlockSpec((tile, 1), lambda i: (i, 0)),
            # Whole table resident in VMEM (constant block index across the grid).
            pl.BlockSpec((t_len, c_pad), lambda i: (0, 0)),
        ],
        out_specs=pl.BlockSpec((tile, c_pad), lambda i: (i, 0)),
        compiler_params=pltpu.CompilerParams(
            dimension_semantics=("parallel",),      # disjoint output tiles -> megacore-shardable
        ),
        cost_estimate=pl.CostEstimate(
            flops=2 * n_pad * t_len * c_pad,
            transcendentals=0,
            bytes_accessed=(n_pad * c_pad * itemsize          # output writes
                            + n_pad * 4                        # index reads
                            + t_len * c_pad * itemsize),       # table read (once)
        ),
    )(idx2, table)

    out = out_padded[:n, :channels]
    return out.reshape(t.shape + (channels,))


if __name__ == "__main__":
    key = jax.random.PRNGKey(0)
    k_grid, k_idx, k_grid2, k_idx2 = jax.random.split(key, 4)

    # --- Test 1: shapes implied by the module (small table, channels = 128) ---
    t_len, channels = 16, 128
    # NOTE: PyTorch __init__ uses torch.zeros([t_len, channels]); random init here
    # so the gather is actually exercised.
    grid_param = jax.random.normal(k_grid, (t_len, channels), dtype=jnp.float32)
    t = jax.random.randint(k_idx, (2, 8), minval=0, maxval=t_len, dtype=jnp.int32)

    out = jax.block_until_ready(grid_t_forward(grid_param, t))
    ref = grid_param[t]
    assert out.shape == t.shape + (channels,)
    assert jnp.allclose(out, ref), "Pallas gather mismatch vs reference (test 1)"

    # --- Test 2: larger n, channels not a multiple of 128, negative indices ---
    t_len2, channels2 = 20, 72
    grid_param2 = jax.random.normal(k_grid2, (t_len2, channels2), dtype=jnp.float32)
    t2 = jax.random.randint(k_idx2, (4, 250), minval=-t_len2, maxval=t_len2, dtype=jnp.int32)

    out2 = jax.block_until_ready(grid_t_forward(grid_param2, t2))
    ref2 = grid_param2[jnp.where(t2 < 0, t2 + t_len2, t2)]
    assert out2.shape == t2.shape + (channels2,)
    assert jnp.allclose(out2, ref2), "Pallas gather mismatch vs reference (test 2)"

    print("KERNEL_OK")
</pallas_src>

<mosaic_0001>
module attributes {stable_mosaic.version = 11 : i64} {
  func.func @_gather_kernel(%arg0: i32, %arg1: memref<16x1xi32, #tpu.memory_space<vmem>>, %arg2: memref<16x128xf32, #tpu.memory_space<vmem>>, %arg3: memref<16x128xf32, #tpu.memory_space<vmem>>) attributes {dimension_semantics = [#tpu.dimension_semantics<parallel>], iteration_bounds = array<i64: 1>, scalar_prefetch = 0 : i64, scratch_operands = 0 : i64, tpu.core_type = #tpu.core_type<tc>, window_params = [{transform_indices = @transform_0, window_bounds = array<i64: 16, 1>}, {pipeline_mode = #tpu.pipeline_mode<synchronous>, transform_indices = @transform_1, window_bounds = array<i64: 16, 128>}, {transform_indices = @transform_2, window_bounds = array<i64: 16, 128>}]} {
    %c0 = arith.constant 0 : index
    %c0_0 = arith.constant 0 : index
    %0 = vector.load %arg1[%c0, %c0_0] : memref<16x1xi32, #tpu.memory_space<vmem>>, vector<16x1xi32>
    %1 = tpu.iota {dimensions = array<i32: 1>} : vector<16x16xi32>
    %2 = vector.broadcast %0 : vector<16x1xi32> to vector<16x16xi32>
    %3 = arith.cmpi eq, %2, %1 : vector<16x16xi32>
    %4 = arith.extui %3 : vector<16x16xi1> to vector<16x16xi32>
    %5 = arith.sitofp %4 : vector<16x16xi32> to vector<16x16xf32>
    %c0_1 = arith.constant 0 : index
    %c0_2 = arith.constant 0 : index
    %6 = vector.load %arg2[%c0_1, %c0_2] : memref<16x128xf32, #tpu.memory_space<vmem>>, vector<16x128xf32>
    %cst = arith.constant dense<0.000000e+00> : vector<16x128xf32>
    %7 = tpu.matmul %5, %6, %cst {dimension_numbers = #tpu.dot_dimension_numbers<[1], [0], [0], [1], [0, 0, 1, 1], [], []>} : vector<16x16xf32>, vector<16x128xf32>, vector<16x128xf32> -> vector<16x128xf32>
    %c0_3 = arith.constant 0 : index
    %c0_4 = arith.constant 0 : index
    %8 = vector.load %arg3[%c0_3, %c0_4] : memref<16x128xf32, #tpu.memory_space<vmem>>, vector<16x128xf32>
    tpu.vector_store %arg3[%c0_3, %c0_4], %7 {strides = array<i32>} : memref<16x128xf32, #tpu.memory_space<vmem>>, vector<16x128xf32>,
    return
  }
  func.func @transform_0(%arg0: i32) -> (i32, i32) {
    %c0_i32 = arith.constant 0 : i32
    %c0_i32_0 = arith.constant 0 : i32
    return %arg0, %c0_i32 : i32, i32
  }
  func.func @transform_1(%arg0: i32) -> (i32, i32) {
    %c0_i32 = arith.constant 0 : i32
    %c0_i32_0 = arith.constant 0 : i32
    %c0_i32_1 = arith.constant 0 : i32
    return %c0_i32, %c0_i32_0 : i32, i32
  }
  func.func @transform_2(%arg0: i32) -> (i32, i32) {
    %c0_i32 = arith.constant 0 : i32
    %c0_i32_0 = arith.constant 0 : i32
    return %arg0, %c0_i32 : i32, i32
  }
}

</mosaic_0001>

<llo_original>
// kernel: tpu_custom_call.1
$region0: #{tpu_custom_call.1}
  #allocation0 [shape = 'u32[]', space=smem, size = 0x4, offset = 0x4, fixed_abs, tag = 'smem constant byte address 0x4 - core index']
  #allocation1 [shape = 'u32[144,128]{1,0:T(1,128)}', space=vmem, size = 0x12000, scoped, tag = 'internal scratch']
  %s0 = inlined_call_operand.vmem [shape: s32[16,1], index: 0, kind: input, shape index: {}]
  %s1 = inlined_call_operand.vmem [shape: f32[16,128], index: 1, kind: input, shape index: {}]
  %s2 = inlined_call_operand.hbm [shape: f32[16,128], index: 2, kind: output, shape index: {}]
  %s3 = sld [smem:[#allocation0]]
  $region18: #{tpu_custom_call.1} parent=0
    _
  %s5 = ssub.s32 1, %s3
  %s6 = scalar_select 0, %s5, %s3
  $region1: #{tpu_custom_call.1} parent=0
    #allocation2 [shape = 'u8[8192]{0}', space=vmem, size = 0x2000, scoped, tag = 'output window, operand 0, single buffered']
    #allocation3 [shape = 's32[1]{0}', space=sflag, size = 0x4, scoped, tag = 'scoped memory for tpu_custom_call.1']
    %7 = vsyncpa [#allocation3], 0
    // Predicated region
    $region2: #{tpu_custom_call.1} parent=1 // pred_check
      _
    $region3: #{tpu_custom_call.1} parent=1 // pred_check_branch
      %9 = sbr.rel (0) target = $region5
    $region4: #{tpu_custom_call.1} parent=1 // pred_region
      _
    $region5: #{tpu_custom_call.1} parent=1 // pred_fallthru
      _
    // Predicated region
    $region6: #{tpu_custom_call.1} parent=1 // pred_check
      _
    $region7: #{tpu_custom_call.1} parent=1 // pred_check_branch
      %11 = sbr.rel (0) target = $region9
    $region8: #{tpu_custom_call.1} parent=1 // pred_region
      _
    $region9: #{tpu_custom_call.1} parent=1 // pred_fallthru
      _
    %v12 = vld [vmem:[%s0] sm:$0xff]
    %v13 = vld [vmem:[%s0 + $0x8] sm:$0xff]
    %v14 = vlaneseq
    %v15 = vand.u32 %v14, 127
    %16 = vset.pattern.permute.xlu0 0
    %17 = vperm.xlu0 %16, %v12
    %v18 = vpop.permute.xlu0 %17
    %19 = vset.pattern.permute.xlu0 0
    %20 = vperm.xlu0 %19, %v13
    %v21 = vpop.permute.xlu0 %20
    %vm22 = vcmp.eq.s32.totalorder %v18, %v15
    %vm23 = vcmp.eq.s32.totalorder %v21, %v15
    %v24 = vsel %vm22, 1, 0
    %v25 = vsel %vm23, 1, 0
    %v26 = vcvt.s32.f32 %v24
    %v27 = vcvt.s32.f32 %v25
    %v28 = vld [vmem:[%s1] sm:$0xff]
    %v29 = vld [vmem:[%s1 + $0x8] sm:$0xff]
    %vm30 = vcmask 130048
    %v32 = vsel %vm30, %v26, 0
    %v35 = vsel %vm30, %v27, 0
    %37 = vmatprep.subr.mxu0 0.0
    %38 = vmatpush1.msra.mxu0 %v28
    %39 = vmatprep.subr.mxu0 0.0
    %40 = vmatpush1.msra.mxu0 %v29
    %41 = vmatprep.subr.mxu0 0.0
    %42 = vmatpush1.msra.mxu0 0.0
    %43 = vmatprep.subr.mxu0 0.0
    %44 = vmatpush1.msra.mxu0 0.0
    %45 = vmatprep.subr.mxu0 0.0
    %46 = vmatpush1.msra.mxu0 0.0
    %47 = vmatprep.subr.mxu0 0.0
    %48 = vmatpush1.msra.mxu0 0.0
    %49 = vmatprep.subr.mxu0 0.0
    %50 = vmatpush1.msra.mxu0 0.0
    %51 = vmatprep.subr.mxu0 0.0
    %52 = vmatpush1.msra.mxu0 0.0
    %53 = vmatprep.subr.mxu0 0.0
    %54 = vmatpush1.msra.mxu0 0.0
    %55 = vmatprep.subr.mxu0 0.0
    %56 = vmatpush1.msra.mxu0 0.0
    %57 = vmatprep.subr.mxu0 0.0
    %58 = vmatpush1.msra.mxu0 0.0
    %59 = vmatprep.subr.mxu0 0.0
    %60 = vmatpush1.msra.mxu0 0.0
    %61 = vmatprep.subr.mxu0 0.0
    %62 = vmatpush1.msra.mxu0 0.0
    %63 = vmatprep.subr.mxu0 0.0
    %64 = vmatpush1.msra.mxu0 0.0
    %65 = vmatprep.subr.mxu0 0.0
    %66 = vmatpush1.msra.mxu0 0.0
    %67 = vmatprep.subr.mxu0 0.0
    %68 = vmatpush1.msra.mxu0 0.0
    %69 = vmatprep.subr.mxu0 0.0
    %70 = vmatpush1.msra.mxu0 0.0
    %71 = vmatprep.subr.mxu0 0.0
    %72 = vmatpush1.msra.mxu0 0.0
    %73 = vmatprep.subr.mxu0 0.0
    %74 = vmatpush1.msra.mxu0 0.0
    %75 = vmatprep.subr.mxu0 0.0
    %76 = vmatpush1.msra.mxu0 0.0
    %77 = vmatprep.subr.mxu0 0.0
    %78 = vmatpush1.msra.mxu0 0.0
    %79 = vmatprep.subr.mxu0 0.0
    %80 = vmatpush1.msra.mxu0 0.0
    %81 = vmatprep.subr.mxu0 0.0
    %82 = vmatpush1.msra.mxu0 0.0
    %83 = vmatprep.subr.mxu0 0.0
    %84 = vmatpush1.msra.mxu0 0.0
    %85 = vmatprep.subr.mxu0 0.0
    %86 = vmatpush1.msra.mxu0 0.0
    %87 = vmatprep.subr.mxu0 0.0
    %88 = vmatpush1.msra.mxu0 0.0
    %89 = vmatprep.subr.mxu0 0.0
    %90 = vmatpush1.msra.mxu0 0.0
    %91 = vmatprep.subr.mxu0 0.0
    %92 = vmatpush1.msra.mxu0 0.0
    %93 = vmatprep.subr.mxu0 0.0
    %94 = vmatpush1.msra.mxu0 0.0
    %95 = vmatprep.subr.mxu0 0.0
    %96 = vmatpush1.msra.mxu0 0.0
    %97 = vmatprep.subr.mxu0 0.0
    %98 = vmatpush1.msra.mxu0 0.0
    %99 = vmatprep.subr.mxu0 0.0
    %100 = vmatpush1.msra.mxu0 0.0
    %101 = vmatprep.mubr.f32.mxu0 0.0
    %102 = vmatmul.mubr.f32.gmra.mrb[0].mxu0 %v32
    %v103 = vpop.f32.mrb[0].mxu0
    %v104 = vadd.f32 0.0, %v103
    %v105 = vpop.f32.mrb[0].mxu0
    %106 = vmatprep.mubr.f32.mxu0 0.0
    %107 = vmatmul.mubr.f32.gmra.mrb[0].mxu0 %v35
    %v108 = vpop.f32.mrb[0].mxu0
    %v109 = vadd.f32 0.0, %v108
    %v110 = vpop.f32.mrb[0].mxu0
    %111 = vdwg.mxu0
    %112 = vst [vmem:[#allocation2] sm:$0xff] %v104
    %113 = vst [vmem:[#allocation2 + $0x8] sm:$0xff] %v109
    // Predicated region
    $region10: #{tpu_custom_call.1} parent=1 // pred_check
      _
    $region11: #{tpu_custom_call.1} parent=1 // pred_check_branch
      %115 = sbr.rel (0) target = $region13
    $region12: #{tpu_custom_call.1} parent=1 // pred_region
      %s117 = ssub.s32 256, 256
      %118 = vsyncadd [#allocation3], %s117
      %s119 = sshll.u32 [#allocation2], 4
      %s120 = int_to_ptr.vmem [resolvable:$true] %s119
      %125 = dma.vmem_to_hbm [thread:$0]  %s120, 256, %s2, [#allocation3], 128, 128, 8
    $region13: #{tpu_custom_call.1} parent=1 // pred_fallthru
      _
    // Predicated region
    $region14: #{tpu_custom_call.1} parent=1 // pred_check
      _
    $region15: #{tpu_custom_call.1} parent=1 // pred_check_branch
      %127 = sbr.rel (0) target = $region17
    $region16: #{tpu_custom_call.1} parent=1 // pred_region
      %128 = dma.done [#allocation3], 256
    $region17: #{tpu_custom_call.1} parent=1 // pred_fallthru
      _
    %129 = vsyncpa [#allocation3], 1

</llo_original>
